<compile_context>
chip_gen: v6e
topology: v6e:2x2x1
jax: 0.10.0
libtpu: 0.0.40
codegen_flags: <defaults>
</compile_context>

<pallas_src>
import functools
import math

import jax
import jax.numpy as jnp
from jax import lax
from jax.experimental import pallas as pl
from jax.experimental.pallas import tpu as pltpu


def _round_up(n: int, m: int) -> int:
    return ((n + m - 1) // m) * m


def make_pe_table(d_model: int, max_len: int = 100) -> jnp.ndarray:
    """Deterministic buffer identical to the PyTorch __init__ (host-side glue)."""
    d_pe = d_model // 2
    position = jnp.arange(0, max_len, dtype=jnp.float32)[:, None]
    div_term = jnp.exp(
        jnp.arange(0, d_pe, 2, dtype=jnp.float32) * (-math.log(10000.0) / d_pe)
    )
    angles = position * div_term
    pe = jnp.zeros((max_len, d_pe), dtype=jnp.float32)
    pe = pe.at[:, 0::2].set(jnp.sin(angles))
    pe = pe.at[:, 1::2].set(jnp.cos(angles)[:, : d_pe // 2])
    return pe


def get_rank_from_pts(pts: jnp.ndarray) -> jnp.ndarray:
    """JAX port of the module's static helper (host-side glue, not part of the kernel)."""
    x, y = pts[..., 0], pts[..., 1]
    x_rank = jnp.argsort(jnp.argsort(x, axis=-1), axis=-1)
    y_rank = jnp.argsort(jnp.argsort(y, axis=-1), axis=-1)
    return jnp.stack([x_rank, y_rank], axis=-1)


def _pe2d_kernel_split(f_ref, rank_ref, pe_ref, o_ref, *, precision):
    # f_ref: (TL, D); rank_ref: (TL, 2) i32; pe_ref: (ML, d_pe); o_ref: (TL, D).
    tl = f_ref.shape[0]
    ml, d_pe = pe_ref.shape

    r = rank_ref[...]
    x_idx = r[:, 0:1]
    y_idx = r[:, 1:2]
    lane = lax.broadcasted_iota(jnp.int32, (tl, ml), 1)
    # One-hot selectors (0/1 is exact in bf16 as well as f32).
    x_sel = (lane == x_idx).astype(pe_ref.dtype)
    y_sel = (lane == y_idx).astype(pe_ref.dtype)

    pe_vals = pe_ref[...]
    x_pe = jnp.dot(x_sel, pe_vals, preferred_element_type=jnp.float32, precision=precision)
    y_pe = jnp.dot(y_sel, pe_vals, preferred_element_type=jnp.float32, precision=precision)

    f_vals = f_ref[...].astype(jnp.float32)
    # d_pe % 128 == 0 here, so both half-stores are lane-dense.
    o_ref[:, :d_pe] = (f_vals[:, :d_pe] + x_pe).astype(o_ref.dtype)
    o_ref[:, d_pe:] = (f_vals[:, d_pe:] + y_pe).astype(o_ref.dtype)


def _pe2d_kernel_fused(f_ref, rank_ref, pe_ref, o_ref, *, precision):
    # f_ref: (TL, D); rank_ref: (TL, 2) i32; pe_ref: (2*ML, D) block-diagonal; o_ref: (TL, D).
    tl = f_ref.shape[0]
    two_ml = pe_ref.shape[0]
    ml = two_ml // 2

    r = rank_ref[...]
    x_idx = r[:, 0:1]                      # -> top-left half of the block-diagonal table
    y_idx = r[:, 1:2] + ml                 # -> bottom-right half
    lane = lax.broadcasted_iota(jnp.int32, (tl, two_ml), 1)
    sel = jnp.logical_or(lane == x_idx, lane == y_idx).astype(pe_ref.dtype)

    pe_rows = jnp.dot(sel, pe_ref[...], preferred_element_type=jnp.float32, precision=precision)
    o_ref[...] = (f_ref[...].astype(jnp.float32) + pe_rows).astype(o_ref.dtype)


def positional_encoding_2d_forward(
    f: jnp.ndarray,
    rank: jnp.ndarray,
    pe: jnp.ndarray,
    *,
    rank_upper_bound: int | None = None,
    target_tile_bytes: int = 4 << 20,
    max_tile_rows: int = 4096,
) -> jnp.ndarray:
    """f: (B, L, D); rank: (B, L, 2) int; pe: (max_len, D//2). Returns f + 2-D positional enc.

    rank_upper_bound: optional strict upper bound on rank values (e.g. L for argsort ranks);
    lets the kernel clamp the resident gather table (K-dim) to min(max_len, bound).
    """
    B, L, D = f.shape
    assert D % 2 == 0, "d_model must be even (matches the PyTorch module's assumption)"
    d_pe = D // 2
    max_len = pe.shape[0]
    assert pe.shape == (max_len, d_pe), "pe table must be (max_len, d_model // 2)"

    n_rows = max_len if rank_upper_bound is None else min(max_len, int(rank_upper_bound))
    ml = max(128, _round_up(n_rows, 128))

    out_dtype = f.dtype
    if out_dtype == jnp.bfloat16:
        # bf16 output ULP dominates: single-pass bf16 gather, half the table bytes.
        table_dtype = jnp.bfloat16
        precision = lax.Precision.DEFAULT
        passes = 1
    else:
        # Exact f32 gather (0/1 selector x f32 table at HIGHEST precision).
        table_dtype = jnp.float32
        precision = lax.Precision.HIGHEST
        passes = 6

    split = (d_pe % 128 == 0)
    pe_rows_used = pe[:n_rows].astype(table_dtype)
    if split:
        pe_tbl = jnp.zeros((ml, d_pe), dtype=table_dtype)
        pe_tbl = pe_tbl.at[:n_rows].set(pe_rows_used)
        kernel = functools.partial(_pe2d_kernel_split, precision=precision)
        k_dim = ml
        pe_spec = pl.BlockSpec((ml, d_pe), lambda i: (0, 0))
    else:
        pe_tbl = jnp.zeros((2 * ml, D), dtype=table_dtype)
        pe_tbl = pe_tbl.at[:n_rows, :d_pe].set(pe_rows_used)
        pe_tbl = pe_tbl.at[ml:ml + n_rows, d_pe:].set(pe_rows_used)
        kernel = functools.partial(_pe2d_kernel_fused, precision=precision)
        k_dim = 2 * ml
        pe_spec = pl.BlockSpec((k_dim, D), lambda i: (0, 0))

    table_bytes = int(pe_tbl.size) * jnp.dtype(table_dtype).itemsize
    assert table_bytes <= (16 << 20), (
        f"pe gather table ({table_bytes} bytes) too large to stay VMEM-resident; "
        "pass rank_upper_bound or reduce max_len/d_model."
    )
    # TODO(synk): add a K-tiled (grid axis over table rows) path for very large max_len * d_model.

    N = B * L
    itemsize = jnp.dtype(f.dtype).itemsize

    # Row-tile size: ~target_tile_bytes per (TL, D) tile, TL a multiple of 8 sublanes.
    tl = max(8, min(max_tile_rows, target_tile_bytes // max(1, D * itemsize)))
    tl = (tl // 8) * 8
    tl = min(tl, _round_up(N, 8))
    n_pad = _round_up(N, tl)

    f_flat = f.reshape(N, D)
    rank_flat = rank.reshape(N, 2).astype(jnp.int32)
    if n_pad != N:
        f_flat = jnp.pad(f_flat, ((0, n_pad - N), (0, 0)))
        rank_flat = jnp.pad(rank_flat, ((0, n_pad - N), (0, 0)))  # rank 0 is a valid table row;
        # padded output rows are sliced away below.

    # Explicit VMEM budget: double-buffered f/out tiles + rank tile + (double-buffered) table.
    tile_bytes = tl * D * itemsize
    rank_tile_bytes = tl * 128 * 4          # (TL, 2) i32 block pads to 128 lanes in VMEM
    vmem_need = 2 * (2 * tile_bytes) + 2 * rank_tile_bytes + 2 * table_bytes
    vmem_limit = int(min(64 << 20, max(32 << 20, int(vmem_need * 1.5))))

    grid = (n_pad // tl,)
    out_flat = pl.pallas_call(
        kernel,
        out_shape=jax.ShapeDtypeStruct((n_pad, D), out_dtype),
        grid_spec=pltpu.PrefetchScalarGridSpec(
            num_scalar_prefetch=0,
            grid=grid,
            in_specs=[
                pl.BlockSpec((tl, D), lambda i: (i, 0)),   # f rows
                pl.BlockSpec((tl, 2), lambda i: (i, 0)),   # packed (x_rank, y_rank)
                pe_spec,                                    # resident gather table
            ],
            out_specs=pl.BlockSpec((tl, D), lambda i: (i, 0)),
        ),
        compiler_params=pltpu.CompilerParams(
            dimension_semantics=("parallel",),
            vmem_limit_bytes=vmem_limit,
        ),
        cost_estimate=pl.CostEstimate(
            flops=passes * 2 * n_pad * k_dim * D + n_pad * D,
            transcendentals=0,
            bytes_accessed=2 * n_pad * D * itemsize + table_bytes + n_pad * 2 * 4,
        ),
    )(f_flat, rank_flat, pe_tbl)

    return out_flat[:N].reshape(B, L, D)


if __name__ == "__main__":
    MAX_LEN = 100  # module default
    key = jax.random.PRNGKey(0)
    k1, k2, k3 = jax.random.split(key, 3)

    # --- Primary check: f32, small d_model (fused block-diagonal path, exact gather). ---
    B, L, D = 2, 8, 32
    f = jax.random.normal(k1, (B, L, D), dtype=jnp.float32)
    pts = jax.random.uniform(k2, (B, L, 2), dtype=jnp.float32)
    rank = get_rank_from_pts(pts)                  # (B, L, 2), ranks in [0, L)
    pe = make_pe_table(D, max_len=MAX_LEN)         # (MAX_LEN, D // 2)

    out = positional_encoding_2d_forward(f, rank, pe, rank_upper_bound=L)
    out = jax.block_until_ready(out)

    ref = f + jnp.concatenate([pe[rank[..., 0]], pe[rank[..., 1]]], axis=-1)
    assert out.shape == (B, L, D)
    assert jnp.allclose(out, ref, atol=1e-5, rtol=1e-5), float(jnp.max(jnp.abs(out - ref)))

    # --- Secondary check: bf16, d_pe % 128 == 0 (split one-hot path, single-pass bf16 gather). ---
    D2 = 256
    f2 = jax.random.normal(k3, (B, L, D2), dtype=jnp.bfloat16)
    pe2 = make_pe_table(D2, max_len=MAX_LEN)
    out2 = positional_encoding_2d_forward(f2, rank, pe2, rank_upper_bound=L)
    out2 = jax.block_until_ready(out2)

    ref2 = f2.astype(jnp.float32) + jnp.concatenate(
        [pe2[rank[..., 0]], pe2[rank[..., 1]]], axis=-1
    )
    assert out2.shape == (B, L, D2)
    assert jnp.allclose(out2.astype(jnp.float32), ref2, atol=5e-2, rtol=5e-2), float(
        jnp.max(jnp.abs(out2.astype(jnp.float32) - ref2))
    )

    print("KERNEL_OK")
</pallas_src>

<mosaic_0001>
module attributes {stable_mosaic.version = 11 : i64} {
  func.func @_pe2d_kernel_fused(%arg0: i32, %arg1: memref<16x32xf32, #tpu.memory_space<vmem>>, %arg2: memref<16x2xi32, #tpu.memory_space<vmem>>, %arg3: memref<256x32xf32, #tpu.memory_space<vmem>>, %arg4: memref<16x32xf32, #tpu.memory_space<vmem>>) attributes {dimension_semantics = [#tpu.dimension_semantics<parallel>], iteration_bounds = array<i64: 1>, scalar_prefetch = 0 : i64, scratch_operands = 0 : i64, tpu.core_type = #tpu.core_type<tc>, window_params = [{transform_indices = @transform_0, window_bounds = array<i64: 16, 32>}, {transform_indices = @transform_1, window_bounds = array<i64: 16, 2>}, {pipeline_mode = #tpu.pipeline_mode<synchronous>, transform_indices = @transform_2, window_bounds = array<i64: 256, 32>}, {transform_indices = @transform_3, window_bounds = array<i64: 16, 32>}]} {
    %c0 = arith.constant 0 : index
    %c0_0 = arith.constant 0 : index
    %0 = vector.load %arg2[%c0, %c0_0] : memref<16x2xi32, #tpu.memory_space<vmem>>, vector<16x2xi32>
    %1 = vector.extract_strided_slice %0 {offsets = [0, 0], sizes = [16, 1], strides = [1, 1]} : vector<16x2xi32> to vector<16x1xi32>
    %2 = vector.extract_strided_slice %0 {offsets = [0, 1], sizes = [16, 1], strides = [1, 1]} : vector<16x2xi32> to vector<16x1xi32>
    %c128_i32 = arith.constant 128 : i32
    %3 = vector.broadcast %c128_i32 : i32 to vector<16x1xi32>
    %4 = arith.addi %2, %3 : vector<16x1xi32>
    %5 = tpu.iota {dimensions = array<i32: 1>} : vector<16x256xi32>
    %6 = vector.broadcast %1 : vector<16x1xi32> to vector<16x256xi32>
    %7 = arith.cmpi eq, %5, %6 : vector<16x256xi32>
    %8 = vector.broadcast %4 : vector<16x1xi32> to vector<16x256xi32>
    %9 = arith.cmpi eq, %5, %8 : vector<16x256xi32>
    %10 = arith.ori %7, %9 : vector<16x256xi1>
    %11 = arith.extui %10 : vector<16x256xi1> to vector<16x256xi32>
    %12 = arith.sitofp %11 : vector<16x256xi32> to vector<16x256xf32>
    %c0_1 = arith.constant 0 : index
    %c0_2 = arith.constant 0 : index
    %13 = vector.load %arg3[%c0_1, %c0_2] : memref<256x32xf32, #tpu.memory_space<vmem>>, vector<256x32xf32>
    %cst = arith.constant dense<0.000000e+00> : vector<16x32xf32>
    %14 = tpu.matmul %12, %13, %cst {dimension_numbers = #tpu.dot_dimension_numbers<[1], [0], [0], [1], [0, 0, 1, 1], [], []>, precision = #tpu.contract_precision<fp32>} : vector<16x256xf32>, vector<256x32xf32>, vector<16x32xf32> -> vector<16x32xf32>
    %c0_3 = arith.constant 0 : index
    %c0_4 = arith.constant 0 : index
    %15 = vector.load %arg1[%c0_3, %c0_4] : memref<16x32xf32, #tpu.memory_space<vmem>>, vector<16x32xf32>
    %16 = arith.addf %15, %14 : vector<16x32xf32>
    %c0_5 = arith.constant 0 : index
    %c0_6 = arith.constant 0 : index
    %17 = vector.load %arg4[%c0_5, %c0_6] : memref<16x32xf32, #tpu.memory_space<vmem>>, vector<16x32xf32>
    tpu.vector_store %arg4[%c0_5, %c0_6], %16 {strides = array<i32>} : memref<16x32xf32, #tpu.memory_space<vmem>>, vector<16x32xf32>,
    return
  }
  func.func @transform_0(%arg0: i32) -> (i32, i32) {
    %c0_i32 = arith.constant 0 : i32
    %c0_i32_0 = arith.constant 0 : i32
    return %arg0, %c0_i32 : i32, i32
  }
  func.func @transform_1(%arg0: i32) -> (i32, i32) {
    %c0_i32 = arith.constant 0 : i32
    %c0_i32_0 = arith.constant 0 : i32
    return %arg0, %c0_i32 : i32, i32
  }
  func.func @transform_2(%arg0: i32) -> (i32, i32) {
    %c0_i32 = arith.constant 0 : i32
    %c0_i32_0 = arith.constant 0 : i32
    %c0_i32_1 = arith.constant 0 : i32
    return %c0_i32, %c0_i32_0 : i32, i32
  }
  func.func @transform_3(%arg0: i32) -> (i32, i32) {
    %c0_i32 = arith.constant 0 : i32
    %c0_i32_0 = arith.constant 0 : i32
    return %arg0, %c0_i32 : i32, i32
  }
}

</mosaic_0001>

<llo_original>
// kernel: tpu_custom_call.1
$region0: #{tpu_custom_call.1}
  #allocation0 [shape = 'u32[]', space=smem, size = 0x4, offset = 0x4, fixed_abs, tag = 'smem constant byte address 0x4 - core index']
  #allocation1 [shape = 'u32[144,128]{1,0:T(1,128)}', space=vmem, size = 0x12000, scoped, tag = 'internal scratch']
  %s0 = inlined_call_operand.vmem [shape: f32[16,32], index: 0, kind: input, shape index: {}]
  %s1 = inlined_call_operand.vmem [shape: s32[16,2], index: 1, kind: input, shape index: {}]
  %s2 = inlined_call_operand.vmem [shape: f32[256,32], index: 2, kind: input, shape index: {}]
  %s3 = inlined_call_operand.hbm [shape: f32[16,32], index: 3, kind: output, shape index: {}]
  %s4 = sld [smem:[#allocation0]]
  $region22: #{tpu_custom_call.1} parent=0
    _
  %s6 = ssub.s32 1, %s4
  %s7 = scalar_select 0, %s6, %s4
  $region1: #{tpu_custom_call.1} parent=0
    #allocation2 [shape = 'u8[8192]{0}', space=vmem, size = 0x2000, scoped, tag = 'output window, operand 0, single buffered']
    #allocation3 [shape = 's32[1]{0}', space=sflag, size = 0x4, scoped, tag = 'scoped memory for tpu_custom_call.1']
    %8 = vsyncpa [#allocation3], 0
    // Predicated region
    $region2: #{tpu_custom_call.1} parent=1 // pred_check
      _
    $region3: #{tpu_custom_call.1} parent=1 // pred_check_branch
      %10 = sbr.rel (0) target = $region5
    $region4: #{tpu_custom_call.1} parent=1 // pred_region
      _
    $region5: #{tpu_custom_call.1} parent=1 // pred_fallthru
      _
    // Predicated region
    $region6: #{tpu_custom_call.1} parent=1 // pred_check
      _
    $region7: #{tpu_custom_call.1} parent=1 // pred_check_branch
      %12 = sbr.rel (0) target = $region9
    $region8: #{tpu_custom_call.1} parent=1 // pred_region
      _
    $region9: #{tpu_custom_call.1} parent=1 // pred_fallthru
      _
    // Predicated region
    $region10: #{tpu_custom_call.1} parent=1 // pred_check
      _
    $region11: #{tpu_custom_call.1} parent=1 // pred_check_branch
      %14 = sbr.rel (0) target = $region13
    $region12: #{tpu_custom_call.1} parent=1 // pred_region
      _
    $region13: #{tpu_custom_call.1} parent=1 // pred_fallthru
      _
    %v15 = vld [vmem:[%s1] sm:$0xff]
    %v16 = vld [vmem:[%s1 + $0x8] sm:$0xff]
    %v17 = vadd.s32 %v15, 128
    %v18 = vadd.s32 %v16, 128
    %v19 = vlaneseq
    %v20 = vand.u32 %v19, 127
    %v21 = vadd.s32 %v20, 128
    %22 = vset.pattern.permute.xlu0 0
    %23 = vperm.xlu0 %22, %v15
    %v24 = vpop.permute.xlu0 %23
    %25 = vset.pattern.permute.xlu0 0
    %26 = vperm.xlu0 %25, %v16
    %v27 = vpop.permute.xlu0 %26
    %vm28 = vcmp.eq.s32.totalorder %v20, %v24
    %vm29 = vcmp.eq.s32.totalorder %v21, %v24
    %vm30 = vcmp.eq.s32.totalorder %v20, %v27
    %vm31 = vcmp.eq.s32.totalorder %v21, %v27
    %32 = vset.pattern.permute.xlu0 1
    %33 = vperm.xlu0 %32, %v17
    %v34 = vpop.permute.xlu0 %33
    %35 = vset.pattern.permute.xlu0 1
    %36 = vperm.xlu0 %35, %v18
    %v37 = vpop.permute.xlu0 %36
    %vm38 = vcmp.eq.s32.totalorder %v20, %v34
    %vm39 = vcmp.eq.s32.totalorder %v21, %v34
    %vm40 = vcmp.eq.s32.totalorder %v20, %v37
    %vm41 = vcmp.eq.s32.totalorder %v21, %v37
    %vm42 = vmor %vm28, %vm38
    %vm43 = vmor %vm29, %vm39
    %vm44 = vmor %vm30, %vm40
    %vm45 = vmor %vm31, %vm41
    %v46 = vsel %vm42, 1, 0
    %v47 = vsel %vm43, 1, 0
    %v48 = vsel %vm44, 1, 0
    %v49 = vsel %vm45, 1, 0
    %v50 = vcvt.s32.f32 %v46
    %v51 = vcvt.s32.f32 %v47
    %v52 = vcvt.s32.f32 %v48
    %v53 = vcvt.s32.f32 %v49
    %v54 = vld [vmem:[%s2] sm:$0xff]
    %v55 = vld [vmem:[%s2 + $0x8] sm:$0xff]
    %v56 = vld [vmem:[%s2 + $0x10] sm:$0xff]
    %v57 = vld [vmem:[%s2 + $0x18] sm:$0xff]
    %v58 = vld [vmem:[%s2 + $0x20] sm:$0xff]
    %v59 = vld [vmem:[%s2 + $0x28] sm:$0xff]
    %v60 = vld [vmem:[%s2 + $0x30] sm:$0xff]
    %v61 = vld [vmem:[%s2 + $0x38] sm:$0xff]
    %v62 = vld [vmem:[%s2 + $0x40] sm:$0xff]
    %v63 = vld [vmem:[%s2 + $0x48] sm:$0xff]
    %v64 = vld [vmem:[%s2 + $0x50] sm:$0xff]
    %v65 = vld [vmem:[%s2 + $0x58] sm:$0xff]
    %v66 = vld [vmem:[%s2 + $0x60] sm:$0xff]
    %v67 = vld [vmem:[%s2 + $0x68] sm:$0xff]
    %v68 = vld [vmem:[%s2 + $0x70] sm:$0xff]
    %v69 = vld [vmem:[%s2 + $0x78] sm:$0xff]
    %v70 = vld [vmem:[%s2 + $0x80] sm:$0xff]
    %v71 = vld [vmem:[%s2 + $0x88] sm:$0xff]
    %v72 = vld [vmem:[%s2 + $0x90] sm:$0xff]
    %v73 = vld [vmem:[%s2 + $0x98] sm:$0xff]
    %v74 = vld [vmem:[%s2 + $0xa0] sm:$0xff]
    %v75 = vld [vmem:[%s2 + $0xa8] sm:$0xff]
    %v76 = vld [vmem:[%s2 + $0xb0] sm:$0xff]
    %v77 = vld [vmem:[%s2 + $0xb8] sm:$0xff]
    %v78 = vld [vmem:[%s2 + $0xc0] sm:$0xff]
    %v79 = vld [vmem:[%s2 + $0xc8] sm:$0xff]
    %v80 = vld [vmem:[%s2 + $0xd0] sm:$0xff]
    %v81 = vld [vmem:[%s2 + $0xd8] sm:$0xff]
    %v82 = vld [vmem:[%s2 + $0xe0] sm:$0xff]
    %v83 = vld [vmem:[%s2 + $0xe8] sm:$0xff]
    %v84 = vld [vmem:[%s2 + $0xf0] sm:$0xff]
    %v85 = vld [vmem:[%s2 + $0xf8] sm:$0xff]
    %86 = vmatprep.subr.mxu0 0.0
    %v87 = vand.u32 %v69, 4294901760
    %88 = vmatpush1.msra.mxu0 %v87
    %89 = vmatprep.subr.mxu0 0.0
    %v90 = vand.u32 %v68, 4294901760
    %91 = vmatpush1.msra.mxu0 %v90
    %92 = vmatprep.subr.mxu0 0.0
    %v93 = vand.u32 %v67, 4294901760
    %94 = vmatpush1.msra.mxu0 %v93
    %95 = vmatprep.subr.mxu0 0.0
    %v96 = vand.u32 %v66, 4294901760
    %97 = vmatpush1.msra.mxu0 %v96
    %98 = vmatprep.subr.mxu0 0.0
    %v99 = vand.u32 %v65, 4294901760
    %100 = vmatpush1.msra.mxu0 %v99
    %101 = vmatprep.subr.mxu0 0.0
    %v102 = vand.u32 %v64, 4294901760
    %103 = vmatpush1.msra.mxu0 %v102
    %104 = vmatprep.subr.mxu0 0.0
    %v105 = vand.u32 %v63, 4294901760
    %106 = vmatpush1.msra.mxu0 %v105
    %107 = vmatprep.subr.mxu0 0.0
    %v108 = vand.u32 %v62, 4294901760
    %109 = vmatpush1.msra.mxu0 %v108
    %110 = vmatprep.subr.mxu0 0.0
    %v111 = vand.u32 %v61, 4294901760
    %112 = vmatpush1.msra.mxu0 %v111
    %113 = vmatprep.subr.mxu0 0.0
    %v114 = vand.u32 %v60, 4294901760
    %115 = vmatpush1.msra.mxu0 %v114
    %116 = vmatprep.subr.mxu0 0.0
    %v117 = vand.u32 %v59, 4294901760
    %118 = vmatpush1.msra.mxu0 %v117
    %119 = vmatprep.subr.mxu0 0.0
    %v120 = vand.u32 %v58, 4294901760
    %121 = vmatpush1.msra.mxu0 %v120
    %122 = vmatprep.subr.mxu0 0.0
    %v123 = vand.u32 %v57, 4294901760
    %124 = vmatpush1.msra.mxu0 %v123
    %125 = vmatprep.subr.mxu0 0.0
    %v126 = vand.u32 %v56, 4294901760
    %127 = vmatpush1.msra.mxu0 %v126
    %128 = vmatprep.subr.mxu0 0.0
    %v129 = vand.u32 %v55, 4294901760
    %130 = vmatpush1.msra.mxu0 %v129
    %131 = vmatprep.subr.mxu0 0.0
    %v132 = vand.u32 %v54, 4294901760
    %133 = vmatpush1.msra.mxu0 %v132
    %134 = vmatprep.subr.mxu0 0.0
    %v135 = vand.u32 %v85, 4294901760
    %136 = vmatpush2.msra.mxu0 %v135
    %137 = vmatprep.subr.mxu0 0.0
    %v138 = vand.u32 %v84, 4294901760
    %139 = vmatpush2.msra.mxu0 %v138
    %140 = vmatprep.subr.mxu0 0.0
    %v141 = vand.u32 %v83, 4294901760
    %142 = vmatpush2.msra.mxu0 %v141
    %143 = vmatprep.subr.mxu0 0.0
    %v144 = vand.u32 %v82, 4294901760
    %145 = vmatpush2.msra.mxu0 %v144
    %146 = vmatprep.subr.mxu0 0.0
    %v147 = vand.u32 %v81, 4294901760
    %148 = vmatpush2.msra.mxu0 %v147
    %149 = vmatprep.subr.mxu0 0.0
    %v150 = vand.u32 %v80, 4294901760
    %151 = vmatpush2.msra.mxu0 %v150
    %152 = vmatprep.subr.mxu0 0.0
    %v153 = vand.u32 %v79, 4294901760
    %154 = vmatpush2.msra.mxu0 %v153
    %155 = vmatprep.subr.mxu0 0.0
    %v156 = vand.u32 %v78, 4294901760
    %157 = vmatpush2.msra.mxu0 %v156
    %158 = vmatprep.subr.mxu0 0.0
    %v159 = vand.u32 %v77, 4294901760
    %160 = vmatpush2.msra.mxu0 %v159
    %161 = vmatprep.subr.mxu0 0.0
    %v162 = vand.u32 %v76, 4294901760
    %163 = vmatpush2.msra.mxu0 %v162
    %164 = vmatprep.subr.mxu0 0.0
    %v165 = vand.u32 %v75, 4294901760
    %166 = vmatpush2.msra.mxu0 %v165
    %167 = vmatprep.subr.mxu0 0.0
    %v168 = vand.u32 %v74, 4294901760
    %169 = vmatpush2.msra.mxu0 %v168
    %170 = vmatprep.subr.mxu0 0.0
    %v171 = vand.u32 %v73, 4294901760
    %172 = vmatpush2.msra.mxu0 %v171
    %173 = vmatprep.subr.mxu0 0.0
    %v174 = vand.u32 %v72, 4294901760
    %175 = vmatpush2.msra.mxu0 %v174
    %176 = vmatprep.subr.mxu0 0.0
    %v177 = vand.u32 %v71, 4294901760
    %178 = vmatpush2.msra.mxu0 %v177
    %179 = vmatprep.subr.mxu0 0.0
    %v180 = vand.u32 %v70, 4294901760
    %181 = vmatpush2.msra.mxu0 %v180
    %v182 = vand.u32 %v51, 4294901760
    %v183 = vsub.f32 %v51, %v182
    %v184 = vand.u32 %v183, 4294901760
    %v185 = vsub.f32 %v183, %v184
    %v186 = vand.u32 %v185, 4294901760
    %187 = vmatprep.mubr.f32.mxu0 %v186
    %v188 = vand.u32 %v50, 4294901760
    %v189 = vsub.f32 %v50, %v188
    %v190 = vand.u32 %v189, 4294901760
    %v191 = vsub.f32 %v189, %v190
    %v192 = vand.u32 %v191, 4294901760
    %193 = vmatmul.mubr.f32.gmra.mxu0 %v192
    %v194 = vpop.f32.mrf.mxu0
    %v195 = vadd.f32 0.0, %v194
    %v196 = vpop.f32.mrf.mxu0
    %v197 = vand.u32 %v53, 4294901760
    %v198 = vsub.f32 %v53, %v197
    %v199 = vand.u32 %v198, 4294901760
    %v200 = vsub.f32 %v198, %v199
    %v201 = vand.u32 %v200, 4294901760
    %202 = vmatprep.mubr.f32.mxu0 %v201
    %v203 = vand.u32 %v52, 4294901760
    %v204 = vsub.f32 %v52, %v203
    %v205 = vand.u32 %v204, 4294901760
    %v206 = vsub.f32 %v204, %v205
    %v207 = vand.u32 %v206, 4294901760
    %208 = vmatmul.mubr.f32.gmra.mxu0 %v207
    %v209 = vpop.f32.mrf.mxu0
    %v210 = vadd.f32 0.0, %v209
    %v211 = vpop.f32.mrf.mxu0
    %212 = vdwg.mxu0
    %213 = vmatprep.subr.mxu0 0.0
    %v214 = vand.u32 %v69, 4294901760
    %v215 = vsub.f32 %v69, %v214
    %v216 = vand.u32 %v215, 4294901760
    %v217 = vsub.f32 %v215, %v216
    %v218 = vand.u32 %v217, 4294901760
    %219 = vmatpush1.msra.mxu0 %v218
    %220 = vmatprep.subr.mxu0 0.0
    %v221 = vand.u32 %v68, 4294901760
    %v222 = vsub.f32 %v68, %v221
    %v223 = vand.u32 %v222, 4294901760
    %v224 = vsub.f32 %v222, %v223
    %v225 = vand.u32 %v224, 4294901760
    %226 = vmatpush1.msra.mxu0 %v225
    %227 = vmatprep.subr.mxu0 0.0
    %v228 = vand.u32 %v67, 4294901760
    %v229 = vsub.f32 %v67, %v228
    %v230 = vand.u32 %v229, 4294901760
    %v231 = vsub.f32 %v229, %v230
    %v232 = vand.u32 %v231, 4294901760
    %233 = vmatpush1.msra.mxu0 %v232
    %234 = vmatprep.subr.mxu0 0.0
    %v235 = vand.u32 %v66, 4294901760
    %v236 = vsub.f32 %v66, %v235
    %v237 = vand.u32 %v236, 4294901760
    %v238 = vsub.f32 %v236, %v237
    %v239 = vand.u32 %v238, 4294901760
    %240 = vmatpush1.msra.mxu0 %v239
    %241 = vmatprep.subr.mxu0 0.0
    %v242 = vand.u32 %v65, 4294901760
    %v243 = vsub.f32 %v65, %v242
    %v244 = vand.u32 %v243, 4294901760
    %v245 = vsub.f32 %v243, %v244
    %v246 = vand.u32 %v245, 4294901760
    %247 = vmatpush1.msra.mxu0 %v246
    %248 = vmatprep.subr.mxu0 0.0
    %v249 = vand.u32 %v64, 4294901760
    %v250 = vsub.f32 %v64, %v249
    %v251 = vand.u32 %v250, 4294901760
    %v252 = vsub.f32 %v250, %v251
    %v253 = vand.u32 %v252, 4294901760
    %254 = vmatpush1.msra.mxu0 %v253
    %255 = vmatprep.subr.mxu0 0.0
    %v256 = vand.u32 %v63, 4294901760
    %v257 = vsub.f32 %v63, %v256
    %v258 = vand.u32 %v257, 4294901760
    %v259 = vsub.f32 %v257, %v258
    %v260 = vand.u32 %v259, 4294901760
    %261 = vmatpush1.msra.mxu0 %v260
    %262 = vmatprep.subr.mxu0 0.0
    %v263 = vand.u32 %v62, 4294901760
    %v264 = vsub.f32 %v62, %v263
    %v265 = vand.u32 %v264, 4294901760
    %v266 = vsub.f32 %v264, %v265
    %v267 = vand.u32 %v266, 4294901760
    %268 = vmatpush1.msra.mxu0 %v267
    %269 = vmatprep.subr.mxu0 0.0
    %v270 = vand.u32 %v61, 4294901760
    %v271 = vsub.f32 %v61, %v270
    %v272 = vand.u32 %v271, 4294901760
    %v273 = vsub.f32 %v271, %v272
    %v274 = vand.u32 %v273, 4294901760
    %275 = vmatpush1.msra.mxu0 %v274
    %276 = vmatprep.subr.mxu0 0.0
    %v277 = vand.u32 %v60, 4294901760
    %v278 = vsub.f32 %v60, %v277
    %v279 = vand.u32 %v278, 4294901760
    %v280 = vsub.f32 %v278, %v279
    %v281 = vand.u32 %v280, 4294901760
    %282 = vmatpush1.msra.mxu0 %v281
    %283 = vmatprep.subr.mxu0 0.0
    %v284 = vand.u32 %v59, 4294901760
    %v285 = vsub.f32 %v59, %v284
    %v286 = vand.u32 %v285, 4294901760
    %v287 = vsub.f32 %v285, %v286
    %v288 = vand.u32 %v287, 4294901760
    %289 = vmatpush1.msra.mxu0 %v288
    %290 = vmatprep.subr.mxu0 0.0
    %v291 = vand.u32 %v58, 4294901760
    %v292 = vsub.f32 %v58, %v291
    %v293 = vand.u32 %v292, 4294901760
    %v294 = vsub.f32 %v292, %v293
    %v295 = vand.u32 %v294, 4294901760
    %296 = vmatpush1.msra.mxu0 %v295
    %297 = vmatprep.subr.mxu0 0.0
    %v298 = vand.u32 %v57, 4294901760
    %v299 = vsub.f32 %v57, %v298
    %v300 = vand.u32 %v299, 4294901760
    %v301 = vsub.f32 %v299, %v300
    %v302 = vand.u32 %v301, 4294901760
    %303 = vmatpush1.msra.mxu0 %v302
    %304 = vmatprep.subr.mxu0 0.0
    %v305 = vand.u32 %v56, 4294901760
    %v306 = vsub.f32 %v56, %v305
    %v307 = vand.u32 %v306, 4294901760
    %v308 = vsub.f32 %v306, %v307
    %v309 = vand.u32 %v308, 4294901760
    %310 = vmatpush1.msra.mxu0 %v309
    %311 = vmatprep.subr.mxu0 0.0
    %v312 = vand.u32 %v55, 4294901760
    %v313 = vsub.f32 %v55, %v312
    %v314 = vand.u32 %v313, 4294901760
    %v315 = vsub.f32 %v313, %v314
    %v316 = vand.u32 %v315, 4294901760
    %317 = vmatpush1.msra.mxu0 %v316
    %318 = vmatprep.subr.mxu0 0.0
    %v319 = vand.u32 %v54, 4294901760
    %v320 = vsub.f32 %v54, %v319
    %v321 = vand.u32 %v320, 4294901760
    %v322 = vsub.f32 %v320, %v321
    %v323 = vand.u32 %v322, 4294901760
    %324 = vmatpush1.msra.mxu0 %v323
    %325 = vmatprep.subr.mxu0 0.0
    %v326 = vand.u32 %v85, 4294901760
    %v327 = vsub.f32 %v85, %v326
    %v328 = vand.u32 %v327, 4294901760
    %v329 = vsub.f32 %v327, %v328
    %v330 = vand.u32 %v329, 4294901760
    %331 = vmatpush2.msra.mxu0 %v330
    %332 = vmatprep.subr.mxu0 0.0
    %v333 = vand.u32 %v84, 4294901760
    %v334 = vsub.f32 %v84, %v333
    %v335 = vand.u32 %v334, 4294901760
    %v336 = vsub.f32 %v334, %v335
    %v337 = vand.u32 %v336, 4294901760
    %338 = vmatpush2.msra.mxu0 %v337
    %339 = vmatprep.subr.mxu0 0.0
    %v340 = vand.u32 %v83, 4294901760
    %v341 = vsub.f32 %v83, %v340
    %v342 = vand.u32 %v341, 4294901760
    %v343 = vsub.f32 %v341, %v342
    %v344 = vand.u32 %v343, 4294901760
    %345 = vmatpush2.msra.mxu0 %v344
    %346 = vmatprep.subr.mxu0 0.0
    %v347 = vand.u32 %v82, 4294901760
    %v348 = vsub.f32 %v82, %v347
    %v349 = vand.u32 %v348, 4294901760
    %v350 = vsub.f32 %v348, %v349
    %v351 = vand.u32 %v350, 4294901760
    %352 = vmatpush2.msra.mxu0 %v351
    %353 = vmatprep.subr.mxu0 0.0
    %v354 = vand.u32 %v81, 4294901760
    %v355 = vsub.f32 %v81, %v354
    %v356 = vand.u32 %v355, 4294901760
    %v357 = vsub.f32 %v355, %v356
    %v358 = vand.u32 %v357, 4294901760
    %359 = vmatpush2.msra.mxu0 %v358
    %360 = vmatprep.subr.mxu0 0.0
    %v361 = vand.u32 %v80, 4294901760
    %v362 = vsub.f32 %v80, %v361
    %v363 = vand.u32 %v362, 4294901760
    %v364 = vsub.f32 %v362, %v363
    %v365 = vand.u32 %v364, 4294901760
    %366 = vmatpush2.msra.mxu0 %v365
    %367 = vmatprep.subr.mxu0 0.0
    %v368 = vand.u32 %v79, 4294901760
    %v369 = vsub.f32 %v79, %v368
    %v370 = vand.u32 %v369, 4294901760
    %v371 = vsub.f32 %v369, %v370
    %v372 = vand.u32 %v371, 4294901760
    %373 = vmatpush2.msra.mxu0 %v372
    %374 = vmatprep.subr.mxu0 0.0
    %v375 = vand.u32 %v78, 4294901760
    %v376 = vsub.f32 %v78, %v375
    %v377 = vand.u32 %v376, 4294901760
    %v378 = vsub.f32 %v376, %v377
    %v379 = vand.u32 %v378, 4294901760
    %380 = vmatpush2.msra.mxu0 %v379
    %381 = vmatprep.subr.mxu0 0.0
    %v382 = vand.u32 %v77, 4294901760
    %v383 = vsub.f32 %v77, %v382
    %v384 = vand.u32 %v383, 4294901760
    %v385 = vsub.f32 %v383, %v384
    %v386 = vand.u32 %v385, 4294901760
    %387 = vmatpush2.msra.mxu0 %v386
    %388 = vmatprep.subr.mxu0 0.0
    %v389 = vand.u32 %v76, 4294901760
    %v390 = vsub.f32 %v76, %v389
    %v391 = vand.u32 %v390, 4294901760
    %v392 = vsub.f32 %v390, %v391
    %v393 = vand.u32 %v392, 4294901760
    %394 = vmatpush2.msra.mxu0 %v393
    %395 = vmatprep.subr.mxu0 0.0
    %v396 = vand.u32 %v75, 4294901760
    %v397 = vsub.f32 %v75, %v396
    %v398 = vand.u32 %v397, 4294901760
    %v399 = vsub.f32 %v397, %v398
    %v400 = vand.u32 %v399, 4294901760
    %401 = vmatpush2.msra.mxu0 %v400
    %402 = vmatprep.subr.mxu0 0.0
    %v403 = vand.u32 %v74, 4294901760
    %v404 = vsub.f32 %v74, %v403
    %v405 = vand.u32 %v404, 4294901760
    %v406 = vsub.f32 %v404, %v405
    %v407 = vand.u32 %v406, 4294901760
    %408 = vmatpush2.msra.mxu0 %v407
    %409 = vmatprep.subr.mxu0 0.0
    %v410 = vand.u32 %v73, 4294901760
    %v411 = vsub.f32 %v73, %v410
    %v412 = vand.u32 %v411, 4294901760
    %v413 = vsub.f32 %v411, %v412
    %v414 = vand.u32 %v413, 4294901760
    %415 = vmatpush2.msra.mxu0 %v414
    %416 = vmatprep.subr.mxu0 0.0
    %v417 = vand.u32 %v72, 4294901760
    %v418 = vsub.f32 %v72, %v417
    %v419 = vand.u32 %v418, 4294901760
    %v420 = vsub.f32 %v418, %v419
    %v421 = vand.u32 %v420, 4294901760
    %422 = vmatpush2.msra.mxu0 %v421
    %423 = vmatprep.subr.mxu0 0.0
    %v424 = vand.u32 %v71, 4294901760
    %v425 = vsub.f32 %v71, %v424
    %v426 = vand.u32 %v425, 4294901760
    %v427 = vsub.f32 %v425, %v426
    %v428 = vand.u32 %v427, 4294901760
    %429 = vmatpush2.msra.mxu0 %v428
    %430 = vmatprep.subr.mxu0 0.0
    %v431 = vand.u32 %v70, 4294901760
    %v432 = vsub.f32 %v70, %v431
    %v433 = vand.u32 %v432, 4294901760
    %v434 = vsub.f32 %v432, %v433
    %v435 = vand.u32 %v434, 4294901760
    %436 = vmatpush2.msra.mxu0 %v435
    %v437 = vand.u32 %v51, 4294901760
    %438 = vmatprep.mubr.f32.mxu0 %v437
    %v439 = vand.u32 %v50, 4294901760
    %440 = vmatmul.mubr.f32.gmra.mxu0 %v439
    %v441 = vpop.f32.mrf.mxu0
    %v442 = vadd.f32 %v195, %v441
    %v443 = vpop.f32.mrf.mxu0
    %v444 = vand.u32 %v53, 4294901760
    %445 = vmatprep.mubr.f32.mxu0 %v444
    %v446 = vand.u32 %v52, 4294901760
    %447 = vmatmul.mubr.f32.gmra.mxu0 %v446
    %v448 = vpop.f32.mrf.mxu0
    %v449 = vadd.f32 %v210, %v448
    %v450 = vpop.f32.mrf.mxu0
    %451 = vdwg.mxu0
    %452 = vmatprep.subr.mxu0 0.0
    %v453 = vand.u32 %v69, 4294901760
    %v454 = vsub.f32 %v69, %v453
    %455 = vmatpush1.msra.mxu0 %v454
    %456 = vmatprep.subr.mxu0 0.0
    %v457 = vand.u32 %v68, 4294901760
    %v458 = vsub.f32 %v68, %v457
    %459 = vmatpush1.msra.mxu0 %v458
    %460 = vmatprep.subr.mxu0 0.0
    %v461 = vand.u32 %v67, 4294901760
    %v462 = vsub.f32 %v67, %v461
    %463 = vmatpush1.msra.mxu0 %v462
    %464 = vmatprep.subr.mxu0 0.0
    %v465 = vand.u32 %v66, 4294901760
    %v466 = vsub.f32 %v66, %v465
    %467 = vmatpush1.msra.mxu0 %v466
    %468 = vmatprep.subr.mxu0 0.0
    %v469 = vand.u32 %v65, 4294901760
    %v470 = vsub.f32 %v65, %v469
    %471 = vmatpush1.msra.mxu0 %v470
    %472 = vmatprep.subr.mxu0 0.0
    %v473 = vand.u32 %v64, 4294901760
    %v474 = vsub.f32 %v64, %v473
    %475 = vmatpush1.msra.mxu0 %v474
    %476 = vmatprep.subr.mxu0 0.0
    %v477 = vand.u32 %v63, 4294901760
    %v478 = vsub.f32 %v63, %v477
    %479 = vmatpush1.msra.mxu0 %v478
    %480 = vmatprep.subr.mxu0 0.0
    %v481 = vand.u32 %v62, 4294901760
    %v482 = vsub.f32 %v62, %v481
    %483 = vmatpush1.msra.mxu0 %v482
    %484 = vmatprep.subr.mxu0 0.0
    %v485 = vand.u32 %v61, 4294901760
    %v486 = vsub.f32 %v61, %v485
    %487 = vmatpush1.msra.mxu0 %v486
    %488 = vmatprep.subr.mxu0 0.0
    %v489 = vand.u32 %v60, 4294901760
    %v490 = vsub.f32 %v60, %v489
    %491 = vmatpush1.msra.mxu0 %v490
    %492 = vmatprep.subr.mxu0 0.0
    %v493 = vand.u32 %v59, 4294901760
    %v494 = vsub.f32 %v59, %v493
    %495 = vmatpush1.msra.mxu0 %v494
    %496 = vmatprep.subr.mxu0 0.0
    %v497 = vand.u32 %v58, 4294901760
    %v498 = vsub.f32 %v58, %v497
    %499 = vmatpush1.msra.mxu0 %v498
    %500 = vmatprep.subr.mxu0 0.0
    %v501 = vand.u32 %v57, 4294901760
    %v502 = vsub.f32 %v57, %v501
    %503 = vmatpush1.msra.mxu0 %v502
    %504 = vmatprep.subr.mxu0 0.0
    %v505 = vand.u32 %v56, 4294901760
    %v506 = vsub.f32 %v56, %v505
    %507 = vmatpush1.msra.mxu0 %v506
    %508 = vmatprep.subr.mxu0 0.0
    %v509 = vand.u32 %v55, 4294901760
    %v510 = vsub.f32 %v55, %v509
    %511 = vmatpush1.msra.mxu0 %v510
    %512 = vmatprep.subr.mxu0 0.0
    %v513 = vand.u32 %v54, 4294901760
    %v514 = vsub.f32 %v54, %v513
    %515 = vmatpush1.msra.mxu0 %v514
    %516 = vmatprep.subr.mxu0 0.0
    %v517 = vand.u32 %v85, 4294901760
    %v518 = vsub.f32 %v85, %v517
    %519 = vmatpush2.msra.mxu0 %v518
    %520 = vmatprep.subr.mxu0 0.0
    %v521 = vand.u32 %v84, 4294901760
    %v522 = vsub.f32 %v84, %v521
    %523 = vmatpush2.msra.mxu0 %v522
    %524 = vmatprep.subr.mxu0 0.0
    %v525 = vand.u32 %v83, 4294901760
    %v526 = vsub.f32 %v83, %v525
    %527 = vmatpush2.msra.mxu0 %v526
    %528 = vmatprep.subr.mxu0 0.0
    %v529 = vand.u32 %v82, 4294901760
    %v530 = vsub.f32 %v82, %v529
    %531 = vmatpush2.msra.mxu0 %v530
    %532 = vmatprep.subr.mxu0 0.0
    %v533 = vand.u32 %v81, 4294901760
    %v534 = vsub.f32 %v81, %v533
    %535 = vmatpush2.msra.mxu0 %v534
    %536 = vmatprep.subr.mxu0 0.0
    %v537 = vand.u32 %v80, 4294901760
    %v538 = vsub.f32 %v80, %v537
    %539 = vmatpush2.msra.mxu0 %v538
    %540 = vmatprep.subr.mxu0 0.0
    %v541 = vand.u32 %v79, 4294901760
    %v542 = vsub.f32 %v79, %v541
    %543 = vmatpush2.msra.mxu0 %v542
    %544 = vmatprep.subr.mxu0 0.0
    %v545 = vand.u32 %v78, 4294901760
    %v546 = vsub.f32 %v78, %v545
    %547 = vmatpush2.msra.mxu0 %v546
    %548 = vmatprep.subr.mxu0 0.0
    %v549 = vand.u32 %v77, 4294901760
    %v550 = vsub.f32 %v77, %v549
    %551 = vmatpush2.msra.mxu0 %v550
    %552 = vmatprep.subr.mxu0 0.0
    %v553 = vand.u32 %v76, 4294901760
    %v554 = vsub.f32 %v76, %v553
    %555 = vmatpush2.msra.mxu0 %v554
    %556 = vmatprep.subr.mxu0 0.0
    %v557 = vand.u32 %v75, 4294901760
    %v558 = vsub.f32 %v75, %v557
    %559 = vmatpush2.msra.mxu0 %v558
    %560 = vmatprep.subr.mxu0 0.0
    %v561 = vand.u32 %v74, 4294901760
    %v562 = vsub.f32 %v74, %v561
    %563 = vmatpush2.msra.mxu0 %v562
    %564 = vmatprep.subr.mxu0 0.0
    %v565 = vand.u32 %v73, 4294901760
    %v566 = vsub.f32 %v73, %v565
    %567 = vmatpush2.msra.mxu0 %v566
    %568 = vmatprep.subr.mxu0 0.0
    %v569 = vand.u32 %v72, 4294901760
    %v570 = vsub.f32 %v72, %v569
    %571 = vmatpush2.msra.mxu0 %v570
    %572 = vmatprep.subr.mxu0 0.0
    %v573 = vand.u32 %v71, 4294901760
    %v574 = vsub.f32 %v71, %v573
    %575 = vmatpush2.msra.mxu0 %v574
    %576 = vmatprep.subr.mxu0 0.0
    %v577 = vand.u32 %v70, 4294901760
    %v578 = vsub.f32 %v70, %v577
    %579 = vmatpush2.msra.mxu0 %v578
    %v580 = vand.u32 %v51, 4294901760
    %v581 = vsub.f32 %v51, %v580
    %582 = vmatprep.mubr.f32.mxu0 %v581
    %v583 = vand.u32 %v50, 4294901760
    %v584 = vsub.f32 %v50, %v583
    %585 = vmatmul.mubr.f32.gmra.mxu0 %v584
    %v586 = vpop.f32.mrf.mxu0
    %v587 = vadd.f32 %v442, %v586
    %v588 = vpop.f32.mrf.mxu0
    %v589 = vand.u32 %v53, 4294901760
    %v590 = vsub.f32 %v53, %v589
    %591 = vmatprep.mubr.f32.mxu0 %v590
    %v592 = vand.u32 %v52, 4294901760
    %v593 = vsub.f32 %v52, %v592
    %594 = vmatmul.mubr.f32.gmra.mxu0 %v593
    %v595 = vpop.f32.mrf.mxu0
    %v596 = vadd.f32 %v449, %v595
    %v597 = vpop.f32.mrf.mxu0
    %598 = vdwg.mxu0
    %599 = vmatprep.subr.mxu0 0.0
    %v600 = vand.u32 %v69, 4294901760
    %601 = vmatpush1.msra.mxu0 %v600
    %602 = vmatprep.subr.mxu0 0.0
    %v603 = vand.u32 %v68, 4294901760
    %604 = vmatpush1.msra.mxu0 %v603
    %605 = vmatprep.subr.mxu0 0.0
    %v606 = vand.u32 %v67, 4294901760
    %607 = vmatpush1.msra.mxu0 %v606
    %608 = vmatprep.subr.mxu0 0.0
    %v609 = vand.u32 %v66, 4294901760
    %610 = vmatpush1.msra.mxu0 %v609
    %611 = vmatprep.subr.mxu0 0.0
    %v612 = vand.u32 %v65, 4294901760
    %613 = vmatpush1.msra.mxu0 %v612
    %614 = vmatprep.subr.mxu0 0.0
    %v615 = vand.u32 %v64, 4294901760
    %616 = vmatpush1.msra.mxu0 %v615
    %617 = vmatprep.subr.mxu0 0.0
    %v618 = vand.u32 %v63, 4294901760
    %619 = vmatpush1.msra.mxu0 %v618
    %620 = vmatprep.subr.mxu0 0.0
    %v621 = vand.u32 %v62, 4294901760
    %622 = vmatpush1.msra.mxu0 %v621
    %623 = vmatprep.subr.mxu0 0.0
    %v624 = vand.u32 %v61, 4294901760
    %625 = vmatpush1.msra.mxu0 %v624
    %626 = vmatprep.subr.mxu0 0.0
    %v627 = vand.u32 %v60, 4294901760
    %628 = vmatpush1.msra.mxu0 %v627
    %629 = vmatprep.subr.mxu0 0.0
    %v630 = vand.u32 %v59, 4294901760
    %631 = vmatpush1.msra.mxu0 %v630
    %632 = vmatprep.subr.mxu0 0.0
    %v633 = vand.u32 %v58, 4294901760
    %634 = vmatpush1.msra.mxu0 %v633
    %635 = vmatprep.subr.mxu0 0.0
    %v636 = vand.u32 %v57, 4294901760
    %637 = vmatpush1.msra.mxu0 %v636
    %638 = vmatprep.subr.mxu0 0.0
    %v639 = vand.u32 %v56, 4294901760
    %640 = vmatpush1.msra.mxu0 %v639
    %641 = vmatprep.subr.mxu0 0.0
    %v642 = vand.u32 %v55, 4294901760
    %643 = vmatpush1.msra.mxu0 %v642
    %644 = vmatprep.subr.mxu0 0.0
    %v645 = vand.u32 %v54, 4294901760
    %646 = vmatpush1.msra.mxu0 %v645
    %647 = vmatprep.subr.mxu0 0.0
    %v648 = vand.u32 %v85, 4294901760
    %649 = vmatpush2.msra.mxu0 %v648
    %650 = vmatprep.subr.mxu0 0.0
    %v651 = vand.u32 %v84, 4294901760
    %652 = vmatpush2.msra.mxu0 %v651
    %653 = vmatprep.subr.mxu0 0.0
    %v654 = vand.u32 %v83, 4294901760
    %655 = vmatpush2.msra.mxu0 %v654
    %656 = vmatprep.subr.mxu0 0.0
    %v657 = vand.u32 %v82, 4294901760
    %658 = vmatpush2.msra.mxu0 %v657
    %659 = vmatprep.subr.mxu0 0.0
    %v660 = vand.u32 %v81, 4294901760
    %661 = vmatpush2.msra.mxu0 %v660
    %662 = vmatprep.subr.mxu0 0.0
    %v663 = vand.u32 %v80, 4294901760
    %664 = vmatpush2.msra.mxu0 %v663
    %665 = vmatprep.subr.mxu0 0.0
    %v666 = vand.u32 %v79, 4294901760
    %667 = vmatpush2.msra.mxu0 %v666
    %668 = vmatprep.subr.mxu0 0.0
    %v669 = vand.u32 %v78, 4294901760
    %670 = vmatpush2.msra.mxu0 %v669
    %671 = vmatprep.subr.mxu0 0.0
    %v672 = vand.u32 %v77, 4294901760
    %673 = vmatpush2.msra.mxu0 %v672
    %674 = vmatprep.subr.mxu0 0.0
    %v675 = vand.u32 %v76, 4294901760
    %676 = vmatpush2.msra.mxu0 %v675
    %677 = vmatprep.subr.mxu0 0.0
    %v678 = vand.u32 %v75, 4294901760
    %679 = vmatpush2.msra.mxu0 %v678
    %680 = vmatprep.subr.mxu0 0.0
    %v681 = vand.u32 %v74, 4294901760
    %682 = vmatpush2.msra.mxu0 %v681
    %683 = vmatprep.subr.mxu0 0.0
    %v684 = vand.u32 %v73, 4294901760
    %685 = vmatpush2.msra.mxu0 %v684
    %686 = vmatprep.subr.mxu0 0.0
    %v687 = vand.u32 %v72, 4294901760
    %688 = vmatpush2.msra.mxu0 %v687
    %689 = vmatprep.subr.mxu0 0.0
    %v690 = vand.u32 %v71, 4294901760
    %691 = vmatpush2.msra.mxu0 %v690
    %692 = vmatprep.subr.mxu0 0.0
    %v693 = vand.u32 %v70, 4294901760
    %694 = vmatpush2.msra.mxu0 %v693
    %v695 = vand.u32 %v51, 4294901760
    %v696 = vsub.f32 %v51, %v695
    %v697 = vand.u32 %v696, 4294901760
    %698 = vmatprep.mubr.f32.mxu0 %v697
    %v699 = vand.u32 %v50, 4294901760
    %v700 = vsub.f32 %v50, %v699
    %v701 = vand.u32 %v700, 4294901760
    %702 = vmatmul.mubr.f32.gmra.mxu0 %v701
    %v703 = vpop.f32.mrf.mxu0
    %v704 = vadd.f32 %v587, %v703
    %v705 = vpop.f32.mrf.mxu0
    %v706 = vand.u32 %v53, 4294901760
    %v707 = vsub.f32 %v53, %v706
    %v708 = vand.u32 %v707, 4294901760
    %709 = vmatprep.mubr.f32.mxu0 %v708
    %v710 = vand.u32 %v52, 4294901760
    %v711 = vsub.f32 %v52, %v710
    %v712 = vand.u32 %v711, 4294901760
    %713 = vmatmul.mubr.f32.gmra.mxu0 %v712
    %v714 = vpop.f32.mrf.mxu0
    %v715 = vadd.f32 %v596, %v714
    %v716 = vpop.f32.mrf.mxu0
    %717 = vdwg.mxu0
    %718 = vmatprep.subr.mxu0 0.0
    %v719 = vand.u32 %v69, 4294901760
    %v720 = vsub.f32 %v69, %v719
    %v721 = vand.u32 %v720, 4294901760
    %722 = vmatpush1.msra.mxu0 %v721
    %723 = vmatprep.subr.mxu0 0.0
    %v724 = vand.u32 %v68, 4294901760
    %v725 = vsub.f32 %v68, %v724
    %v726 = vand.u32 %v725, 4294901760
    %727 = vmatpush1.msra.mxu0 %v726
    %728 = vmatprep.subr.mxu0 0.0
    %v729 = vand.u32 %v67, 4294901760
    %v730 = vsub.f32 %v67, %v729
    %v731 = vand.u32 %v730, 4294901760
    %732 = vmatpush1.msra.mxu0 %v731
    %733 = vmatprep.subr.mxu0 0.0
    %v734 = vand.u32 %v66, 4294901760
    %v735 = vsub.f32 %v66, %v734
    %v736 = vand.u32 %v735, 4294901760
    %737 = vmatpush1.msra.mxu0 %v736
    %738 = vmatprep.subr.mxu0 0.0
    %v739 = vand.u32 %v65, 4294901760
    %v740 = vsub.f32 %v65, %v739
    %v741 = vand.u32 %v740, 4294901760
    %742 = vmatpush1.msra.mxu0 %v741
    %743 = vmatprep.subr.mxu0 0.0
    %v744 = vand.u32 %v64, 4294901760
    %v745 = vsub.f32 %v64, %v744
    %v746 = vand.u32 %v745, 4294901760
    %747 = vmatpush1.msra.mxu0 %v746
    %748 = vmatprep.subr.mxu0 0.0
    %v749 = vand.u32 %v63, 4294901760
    %v750 = vsub.f32 %v63, %v749
    %v751 = vand.u32 %v750, 4294901760
    %752 = vmatpush1.msra.mxu0 %v751
    %753 = vmatprep.subr.mxu0 0.0
    %v754 = vand.u32 %v62, 4294901760
    %v755 = vsub.f32 %v62, %v754
    %v756 = vand.u32 %v755, 4294901760
    %757 = vmatpush1.msra.mxu0 %v756
    %758 = vmatprep.subr.mxu0 0.0
    %v759 = vand.u32 %v61, 4294901760
    %v760 = vsub.f32 %v61, %v759
    %v761 = vand.u32 %v760, 4294901760
    %762 = vmatpush1.msra.mxu0 %v761
    %763 = vmatprep.subr.mxu0 0.0
    %v764 = vand.u32 %v60, 4294901760
    %v765 = vsub.f32 %v60, %v764
    %v766 = vand.u32 %v765, 4294901760
    %767 = vmatpush1.msra.mxu0 %v766
    %768 = vmatprep.subr.mxu0 0.0
    %v769 = vand.u32 %v59, 4294901760
    %v770 = vsub.f32 %v59, %v769
    %v771 = vand.u32 %v770, 4294901760
    %772 = vmatpush1.msra.mxu0 %v771
    %773 = vmatprep.subr.mxu0 0.0
    %v774 = vand.u32 %v58, 4294901760
    %v775 = vsub.f32 %v58, %v774
    %v776 = vand.u32 %v775, 4294901760
    %777 = vmatpush1.msra.mxu0 %v776
    %778 = vmatprep.subr.mxu0 0.0
    %v779 = vand.u32 %v57, 4294901760
    %v780 = vsub.f32 %v57, %v779
    %v781 = vand.u32 %v780, 4294901760
    %782 = vmatpush1.msra.mxu0 %v781
    %783 = vmatprep.subr.mxu0 0.0
    %v784 = vand.u32 %v56, 4294901760
    %v785 = vsub.f32 %v56, %v784
    %v786 = vand.u32 %v785, 4294901760
    %787 = vmatpush1.msra.mxu0 %v786
    %788 = vmatprep.subr.mxu0 0.0
    %v789 = vand.u32 %v55, 4294901760
    %v790 = vsub.f32 %v55, %v789
    %v791 = vand.u32 %v790, 4294901760
    %792 = vmatpush1.msra.mxu0 %v791
    %793 = vmatprep.subr.mxu0 0.0
    %v794 = vand.u32 %v54, 4294901760
    %v795 = vsub.f32 %v54, %v794
    %v796 = vand.u32 %v795, 4294901760
    %797 = vmatpush1.msra.mxu0 %v796
    %798 = vmatprep.subr.mxu0 0.0
    %v799 = vand.u32 %v85, 4294901760
    %v800 = vsub.f32 %v85, %v799
    %v801 = vand.u32 %v800, 4294901760
    %802 = vmatpush2.msra.mxu0 %v801
    %803 = vmatprep.subr.mxu0 0.0
    %v804 = vand.u32 %v84, 4294901760
    %v805 = vsub.f32 %v84, %v804
    %v806 = vand.u32 %v805, 4294901760
    %807 = vmatpush2.msra.mxu0 %v806
    %808 = vmatprep.subr.mxu0 0.0
    %v809 = vand.u32 %v83, 4294901760
    %v810 = vsub.f32 %v83, %v809
    %v811 = vand.u32 %v810, 4294901760
    %812 = vmatpush2.msra.mxu0 %v811
    %813 = vmatprep.subr.mxu0 0.0
    %v814 = vand.u32 %v82, 4294901760
    %v815 = vsub.f32 %v82, %v814
    %v816 = vand.u32 %v815, 4294901760
    %817 = vmatpush2.msra.mxu0 %v816
    %818 = vmatprep.subr.mxu0 0.0
    %v819 = vand.u32 %v81, 4294901760
    %v820 = vsub.f32 %v81, %v819
    %v821 = vand.u32 %v820, 4294901760
    %822 = vmatpush2.msra.mxu0 %v821
    %823 = vmatprep.subr.mxu0 0.0
    %v824 = vand.u32 %v80, 4294901760
    %v825 = vsub.f32 %v80, %v824
    %v826 = vand.u32 %v825, 4294901760
    %827 = vmatpush2.msra.mxu0 %v826
    %828 = vmatprep.subr.mxu0 0.0
    %v829 = vand.u32 %v79, 4294901760
    %v830 = vsub.f32 %v79, %v829
    %v831 = vand.u32 %v830, 4294901760
    %832 = vmatpush2.msra.mxu0 %v831
    %833 = vmatprep.subr.mxu0 0.0
    %v834 = vand.u32 %v78, 4294901760
    %v835 = vsub.f32 %v78, %v834
    %v836 = vand.u32 %v835, 4294901760
    %837 = vmatpush2.msra.mxu0 %v836
    %838 = vmatprep.subr.mxu0 0.0
    %v839 = vand.u32 %v77, 4294901760
    %v840 = vsub.f32 %v77, %v839
    %v841 = vand.u32 %v840, 4294901760
    %842 = vmatpush2.msra.mxu0 %v841
    %843 = vmatprep.subr.mxu0 0.0
    %v844 = vand.u32 %v76, 4294901760
    %v845 = vsub.f32 %v76, %v844
    %v846 = vand.u32 %v845, 4294901760
    %847 = vmatpush2.msra.mxu0 %v846
    %848 = vmatprep.subr.mxu0 0.0
    %v849 = vand.u32 %v75, 4294901760
    %v850 = vsub.f32 %v75, %v849
    %v851 = vand.u32 %v850, 4294901760
    %852 = vmatpush2.msra.mxu0 %v851
    %853 = vmatprep.subr.mxu0 0.0
    %v854 = vand.u32 %v74, 4294901760
    %v855 = vsub.f32 %v74, %v854
    %v856 = vand.u32 %v855, 4294901760
    %857 = vmatpush2.msra.mxu0 %v856
    %858 = vmatprep.subr.mxu0 0.0
    %v859 = vand.u32 %v73, 4294901760
    %v860 = vsub.f32 %v73, %v859
    %v861 = vand.u32 %v860, 4294901760
    %862 = vmatpush2.msra.mxu0 %v861
    %863 = vmatprep.subr.mxu0 0.0
    %v864 = vand.u32 %v72, 4294901760
    %v865 = vsub.f32 %v72, %v864
    %v866 = vand.u32 %v865, 4294901760
    %867 = vmatpush2.msra.mxu0 %v866
    %868 = vmatprep.subr.mxu0 0.0
    %v869 = vand.u32 %v71, 4294901760
    %v870 = vsub.f32 %v71, %v869
    %v871 = vand.u32 %v870, 4294901760
    %872 = vmatpush2.msra.mxu0 %v871
    %873 = vmatprep.subr.mxu0 0.0
    %v874 = vand.u32 %v70, 4294901760
    %v875 = vsub.f32 %v70, %v874
    %v876 = vand.u32 %v875, 4294901760
    %877 = vmatpush2.msra.mxu0 %v876
    %v878 = vand.u32 %v51, 4294901760
    %879 = vmatprep.mubr.f32.mxu0 %v878
    %v880 = vand.u32 %v50, 4294901760
    %881 = vmatmul.mubr.f32.gmra.mxu0 %v880
    %v882 = vpop.f32.mrf.mxu0
    %v883 = vadd.f32 %v704, %v882
    %v884 = vpop.f32.mrf.mxu0
    %v885 = vand.u32 %v53, 4294901760
    %886 = vmatprep.mubr.f32.mxu0 %v885
    %v887 = vand.u32 %v52, 4294901760
    %888 = vmatmul.mubr.f32.gmra.mxu0 %v887
    %v889 = vpop.f32.mrf.mxu0
    %v890 = vadd.f32 %v715, %v889
    %v891 = vpop.f32.mrf.mxu0
    %892 = vdwg.mxu0
    %893 = vmatprep.subr.mxu0 0.0
    %v894 = vand.u32 %v69, 4294901760
    %895 = vmatpush1.msra.mxu0 %v894
    %896 = vmatprep.subr.mxu0 0.0
    %v897 = vand.u32 %v68, 4294901760
    %898 = vmatpush1.msra.mxu0 %v897
    %899 = vmatprep.subr.mxu0 0.0
    %v900 = vand.u32 %v67, 4294901760
    %901 = vmatpush1.msra.mxu0 %v900
    %902 = vmatprep.subr.mxu0 0.0
    %v903 = vand.u32 %v66, 4294901760
    %904 = vmatpush1.msra.mxu0 %v903
    %905 = vmatprep.subr.mxu0 0.0
    %v906 = vand.u32 %v65, 4294901760
    %907 = vmatpush1.msra.mxu0 %v906
    %908 = vmatprep.subr.mxu0 0.0
    %v909 = vand.u32 %v64, 4294901760
    %910 = vmatpush1.msra.mxu0 %v909
    %911 = vmatprep.subr.mxu0 0.0
    %v912 = vand.u32 %v63, 4294901760
    %913 = vmatpush1.msra.mxu0 %v912
    %914 = vmatprep.subr.mxu0 0.0
    %v915 = vand.u32 %v62, 4294901760
    %916 = vmatpush1.msra.mxu0 %v915
    %917 = vmatprep.subr.mxu0 0.0
    %v918 = vand.u32 %v61, 4294901760
    %919 = vmatpush1.msra.mxu0 %v918
    %920 = vmatprep.subr.mxu0 0.0
    %v921 = vand.u32 %v60, 4294901760
    %922 = vmatpush1.msra.mxu0 %v921
    %923 = vmatprep.subr.mxu0 0.0
    %v924 = vand.u32 %v59, 4294901760
    %925 = vmatpush1.msra.mxu0 %v924
    %926 = vmatprep.subr.mxu0 0.0
    %v927 = vand.u32 %v58, 4294901760
    %928 = vmatpush1.msra.mxu0 %v927
    %929 = vmatprep.subr.mxu0 0.0
    %v930 = vand.u32 %v57, 4294901760
    %931 = vmatpush1.msra.mxu0 %v930
    %932 = vmatprep.subr.mxu0 0.0
    %v933 = vand.u32 %v56, 4294901760
    %934 = vmatpush1.msra.mxu0 %v933
    %935 = vmatprep.subr.mxu0 0.0
    %v936 = vand.u32 %v55, 4294901760
    %937 = vmatpush1.msra.mxu0 %v936
    %938 = vmatprep.subr.mxu0 0.0
    %v939 = vand.u32 %v54, 4294901760
    %940 = vmatpush1.msra.mxu0 %v939
    %941 = vmatprep.subr.mxu0 0.0
    %v942 = vand.u32 %v85, 4294901760
    %943 = vmatpush2.msra.mxu0 %v942
    %944 = vmatprep.subr.mxu0 0.0
    %v945 = vand.u32 %v84, 4294901760
    %946 = vmatpush2.msra.mxu0 %v945
    %947 = vmatprep.subr.mxu0 0.0
    %v948 = vand.u32 %v83, 4294901760
    %949 = vmatpush2.msra.mxu0 %v948
    %950 = vmatprep.subr.mxu0 0.0
    %v951 = vand.u32 %v82, 4294901760
    %952 = vmatpush2.msra.mxu0 %v951
    %953 = vmatprep.subr.mxu0 0.0
    %v954 = vand.u32 %v81, 4294901760
    %955 = vmatpush2.msra.mxu0 %v954
    %956 = vmatprep.subr.mxu0 0.0
    %v957 = vand.u32 %v80, 4294901760
    %958 = vmatpush2.msra.mxu0 %v957
    %959 = vmatprep.subr.mxu0 0.0
    %v960 = vand.u32 %v79, 4294901760
    %961 = vmatpush2.msra.mxu0 %v960
    %962 = vmatprep.subr.mxu0 0.0
    %v963 = vand.u32 %v78, 4294901760
    %964 = vmatpush2.msra.mxu0 %v963
    %965 = vmatprep.subr.mxu0 0.0
    %v966 = vand.u32 %v77, 4294901760
    %967 = vmatpush2.msra.mxu0 %v966
    %968 = vmatprep.subr.mxu0 0.0
    %v969 = vand.u32 %v76, 4294901760
    %970 = vmatpush2.msra.mxu0 %v969
    %971 = vmatprep.subr.mxu0 0.0
    %v972 = vand.u32 %v75, 4294901760
    %973 = vmatpush2.msra.mxu0 %v972
    %974 = vmatprep.subr.mxu0 0.0
    %v975 = vand.u32 %v74, 4294901760
    %976 = vmatpush2.msra.mxu0 %v975
    %977 = vmatprep.subr.mxu0 0.0
    %v978 = vand.u32 %v73, 4294901760
    %979 = vmatpush2.msra.mxu0 %v978
    %980 = vmatprep.subr.mxu0 0.0
    %v981 = vand.u32 %v72, 4294901760
    %982 = vmatpush2.msra.mxu0 %v981
    %983 = vmatprep.subr.mxu0 0.0
    %v984 = vand.u32 %v71, 4294901760
    %985 = vmatpush2.msra.mxu0 %v984
    %986 = vmatprep.subr.mxu0 0.0
    %v987 = vand.u32 %v70, 4294901760
    %988 = vmatpush2.msra.mxu0 %v987
    %v989 = vand.u32 %v51, 4294901760
    %990 = vmatprep.mubr.f32.mxu0 %v989
    %v991 = vand.u32 %v50, 4294901760
    %992 = vmatmul.mubr.f32.gmra.mxu0 %v991
    %v993 = vpop.f32.mrf.mxu0
    %v994 = vadd.f32 %v883, %v993
    %v995 = vpop.f32.mrf.mxu0
    %v996 = vand.u32 %v53, 4294901760
    %997 = vmatprep.mubr.f32.mxu0 %v996
    %v998 = vand.u32 %v52, 4294901760
    %999 = vmatmul.mubr.f32.gmra.mxu0 %v998
    %v1000 = vpop.f32.mrf.mxu0
    %v1001 = vadd.f32 %v890, %v1000
    %v1002 = vpop.f32.mrf.mxu0
    %1003 = vdwg.mxu0
    %v1004 = vld [vmem:[%s0] sm:$0xff]
    %v1005 = vld [vmem:[%s0 + $0x8] sm:$0xff]
    %v1006 = vadd.f32 %v1004, %v994
    %v1007 = vadd.f32 %v1005, %v1001
    %vm1008 = vcmask 261120
    %1009 = vst.msk [vmem:[#allocation2] sm:$0xff] %vm1008, %v1006
    %1010 = vst.msk [vmem:[#allocation2 + $0x8] sm:$0xff] %vm1008, %v1007
    // Predicated region
    $region14: #{tpu_custom_call.1} parent=1 // pred_check
      _
    $region15: #{tpu_custom_call.1} parent=1 // pred_check_branch
      %1012 = sbr.rel (0) target = $region17
    $region16: #{tpu_custom_call.1} parent=1 // pred_region
      %s1014 = ssub.s32 256, 256
      %1015 = vsyncadd [#allocation3], %s1014
      %s1016 = sshll.u32 [#allocation2], 4
      %s1017 = int_to_ptr.vmem [resolvable:$true] %s1016
      %1022 = dma.vmem_to_hbm [thread:$0]  %s1017, 256, %s3, [#allocation3], 128, 128, 8
    $region17: #{tpu_custom_call.1} parent=1 // pred_fallthru
      _
    // Predicated region
    $region18: #{tpu_custom_call.1} parent=1 // pred_check
      _
    $region19: #{tpu_custom_call.1} parent=1 // pred_check_branch
      %1024 = sbr.rel (0) target = $region21
    $region20: #{tpu_custom_call.1} parent=1 // pred_region
      %1025 = dma.done [#allocation3], 256
    $region21: #{tpu_custom_call.1} parent=1 // pred_fallthru
      _
    %1026 = vsyncpa [#allocation3], 1

</llo_original>
